<compile_context>
chip_gen: v7x
topology: tpu7x:2x2x1
jax: 0.10.0
libtpu: 0.0.40
codegen_flags: <defaults>
</compile_context>

<pallas_src>
import jax
import jax.numpy as jnp
from jax import lax
from jax.experimental import pallas as pl
from jax.experimental.pallas import tpu as pltpu


def _make_resblock_kernel(H, W, Cin, Cmid, Cout, Nb):
    HW = H * W

    def kernel(x_ref, w1_ref, b1_ref, w2_ref, b2_ref, m_ref, o_ref):
        w1 = w1_ref[...]          # (Cmid, Cin)       bf16
        b1 = b1_ref[...]          # (Cmid, 1)         f32
        w2 = w2_ref[...]          # (Cout, 9*Cmid)    bf16
        b2 = b2_ref[...]          # (Cout, 1)         f32
        masks = m_ref[...]        # (9, HW)           f32  (precomputed edge masks)

        for nb in range(Nb):                                   # static unroll over images in block
            x = x_ref[nb]                                      # (Cin, HW) f32, lane-dense

            # ---- Conv1: 1x1 conv (BN1 scale folded) + bias + LeakyReLU(0.1) ----
            y1 = jnp.dot(w1, x.astype(jnp.bfloat16),
                         preferred_element_type=jnp.float32)   # (Cmid, HW) f32
            y1 = y1 + b1
            y1 = jnp.maximum(y1, 0.1 * y1)

            # ---- Conv2: 3x3 conv (pad=1) as ONE large-K matmul ----
            # Stack the 9 shifted + edge-masked taps along the sublane (K) axis.
            parts = []
            for ky in range(3):
                for kx in range(3):
                    k = ky * 3 + kx
                    off = (ky - 1) * W + (kx - 1)
                    t = y1 if off == 0 else pltpu.roll(y1, shift=(-off) % HW, axis=1)
                    if k != 4:                                 # centre tap: no roll, no mask
                        t = t * masks[k][None, :]              # zero wrapped rows/cols (f32 VPU)
                    parts.append(t.astype(jnp.bfloat16))
            stacked = jnp.concatenate(parts, axis=0)           # (9*Cmid, HW) bf16

            y2 = jnp.dot(w2, stacked,
                         preferred_element_type=jnp.float32)   # (Cout, HW) f32
            y2 = y2 + b2
            y2 = jnp.maximum(y2, 0.1 * y2)

            # residual add in f32
            o_ref[nb] = (y2 + x).astype(o_ref.dtype)

    return kernel


def _fold_bn(gamma, beta, mean, var, eps):
    scale = gamma / jnp.sqrt(var + eps)
    bias = beta - mean * scale
    return scale, bias


def _edge_masks(H, W):
    """(9, H*W) f32 table: mask[ky*3+kx, hw] == 1 iff the 3x3 tap's source pixel is in-bounds."""
    hh = jnp.arange(H)[:, None]
    ww = jnp.arange(W)[None, :]
    masks = []
    for ky in range(3):
        for kx in range(3):
            dy, dx = ky - 1, kx - 1
            m = ((hh + dy >= 0) & (hh + dy < H) & (ww + dx >= 0) & (ww + dx < W))
            masks.append(m.astype(jnp.float32).reshape(H * W))
    return jnp.stack(masks)                                    # (9, HW)


def _choose_block_n(N, Cin, Cout, HW, target_bytes=2 << 20):
    """Pack images per grid step so x+out blocks are ~target_bytes, keep >=2 steps for v7x."""
    per_img = (Cin + Cout) * HW * 4
    nb = int(max(1, min(N, target_bytes // max(per_img, 1))))
    while nb > 1 and (N // nb) < 2:                            # keep both v7x TCs busy
        nb -= 1
    while N % nb != 0:                                         # require even split
        nb -= 1
    return nb


def resblock_forward(x_nchw, w1_oihw, bn1, w2_oihw, bn2, eps=1e-5):
    """x_nchw: (N, Cin, H, W) f32. w1_oihw: (Cmid, Cin, 1, 1). w2_oihw: (Cin, Cmid, 3, 3).
    bn1/bn2 = (gamma, beta, running_mean, running_var). Returns (N, Cin, H, W)."""
    N, Cin, H, W = x_nchw.shape
    Cmid = w1_oihw.shape[0]
    Cout = w2_oihw.shape[0]
    assert Cout == Cin, "ResBlock requires Conv2 out_channels == input channels"
    HW = H * W
    assert HW % 128 == 0, "flattened spatial dim must be a multiple of 128"

    # Fold BN (eval mode) scales into the conv weights; only biases stay in-kernel.
    # TODO(synk): training-mode BatchNorm (batch statistics) is not implemented here.
    s1, b1 = _fold_bn(*bn1, eps)
    s2, b2 = _fold_bn(*bn2, eps)
    w1f = (w1_oihw[:, :, 0, 0] * s1[:, None]).astype(jnp.bfloat16)          # (Cmid, Cin)
    w2f = w2_oihw * s2[:, None, None, None]                                 # (Cout, Cmid, 3, 3)
    # tap-major flatten so K index = (ky*3+kx)*Cmid + c, matching the stacked operand.
    w2flat = jnp.transpose(w2f, (0, 2, 3, 1)).reshape(Cout, 9 * Cmid).astype(jnp.bfloat16)
    b1c = b1.reshape(Cmid, 1).astype(jnp.float32)
    b2c = b2.reshape(Cout, 1).astype(jnp.float32)
    masks = _edge_masks(H, W)                                               # (9, HW) f32

    x_flat = x_nchw.reshape(N, Cin, HW)                                     # lane-dense, no transpose

    Nb = _choose_block_n(N, Cin, Cout, HW)
    grid = (N // Nb,)

    kernel = _make_resblock_kernel(H, W, Cin, Cmid, Cout, Nb)
    # TODO(synk): at very large H*W add an H-strip grid axis (1-row halo) instead of
    # whole-image blocks; the 32 MiB VMEM budget below is chosen to fit all generations
    # (v5e 16 MiB default scoped limit raised, v7x 64 MiB physical respected).
    out_flat = pl.pallas_call(
        kernel,
        out_shape=jax.ShapeDtypeStruct((N, Cout, HW), x_nchw.dtype),
        grid_spec=pltpu.PrefetchScalarGridSpec(
            num_scalar_prefetch=0,
            grid=grid,
            in_specs=[
                pl.BlockSpec((Nb, Cin, HW), lambda n: (n, 0, 0)),      # x (lane-dense)
                pl.BlockSpec((Cmid, Cin), lambda n: (0, 0)),           # w1 (BN1 folded, bf16)
                pl.BlockSpec((Cmid, 1), lambda n: (0, 0)),             # bn1 bias
                pl.BlockSpec((Cout, 9 * Cmid), lambda n: (0, 0)),      # w2 (BN2 folded, tap-major, bf16)
                pl.BlockSpec((Cout, 1), lambda n: (0, 0)),             # bn2 bias
                pl.BlockSpec((9, HW), lambda n: (0, 0)),               # precomputed edge masks
            ],
            out_specs=pl.BlockSpec((Nb, Cout, HW), lambda n: (n, 0, 0)),
        ),
        compiler_params=pltpu.CompilerParams(
            dimension_semantics=("parallel",),                          # batch -> both TCs on v7x
            vmem_limit_bytes=32 * 1024 * 1024),
    )(x_flat, w1f, b1c, w2flat, b2c, masks)

    return out_flat.reshape(N, Cout, H, W)


def resblock_reference(x, w1_oihw, bn1, w2_oihw, bn2, eps=1e-5):
    """Plain-JAX reference mirroring the PyTorch module (eval-mode BN), f32 throughout."""
    def bn_eval(y, params):
        gamma, beta, mean, var = params
        inv = (gamma / jnp.sqrt(var + eps))[None, :, None, None]
        return (y - mean[None, :, None, None]) * inv + beta[None, :, None, None]

    def leaky(y):
        return jnp.where(y > 0, y, 0.1 * y)

    dn = ("NCHW", "OIHW", "NCHW")
    y = lax.conv_general_dilated(x, w1_oihw, (1, 1), "VALID",
                                 dimension_numbers=dn, precision=lax.Precision.HIGHEST)
    y = leaky(bn_eval(y, bn1))
    y = lax.conv_general_dilated(y, w2_oihw, (1, 1), ((1, 1), (1, 1)),
                                 dimension_numbers=dn, precision=lax.Precision.HIGHEST)
    y = leaky(bn_eval(y, bn2))
    return y + x


if __name__ == "__main__":
    # ResBlock(inputs=[Cmid, Cin]): Conv1: Cin -> Cmid (1x1); Conv2: Cmid -> Cin (3x3, pad 1).
    N, Cin, Cmid, H, W = 2, 8, 4, 16, 16
    eps = 1e-5

    key = jax.random.PRNGKey(0)
    k = jax.random.split(key, 11)

    x = jax.random.normal(k[0], (N, Cin, H, W), jnp.float32)
    w1 = 0.2 * jax.random.normal(k[1], (Cmid, Cin, 1, 1), jnp.float32)   # Conv1 weight (OIHW)
    w2 = 0.2 * jax.random.normal(k[2], (Cin, Cmid, 3, 3), jnp.float32)   # Conv2 weight (OIHW)

    def bn_params(kg, kb, km, kv, C):
        gamma = 1.0 + 0.1 * jax.random.normal(kg, (C,), jnp.float32)
        beta = 0.05 * jax.random.normal(kb, (C,), jnp.float32)
        mean = 0.1 * jax.random.normal(km, (C,), jnp.float32)
        var = 1.0 + 0.2 * jax.random.uniform(kv, (C,), jnp.float32)
        return gamma, beta, mean, var

    bn1 = bn_params(k[3], k[4], k[5], k[6], Cmid)
    bn2 = bn_params(k[7], k[8], k[9], k[10], Cin)

    out = resblock_forward(x, w1, bn1, w2, bn2, eps)
    out = jax.block_until_ready(out)

    ref = resblock_reference(x, w1, bn1, w2, bn2, eps)
    assert out.shape == x.shape
    max_err = float(jnp.max(jnp.abs(out - ref)))
    # bf16 matmul operands (f32 accumulation) -> slightly relaxed tolerance vs. pure f32.
    assert jnp.allclose(out, ref, atol=5e-2, rtol=5e-2), f"max abs err = {max_err}"

    print("KERNEL_OK")
</pallas_src>

<mosaic_0001>
module attributes {stable_mosaic.version = 11 : i64} {
  func.func @kernel(%arg0: i32, %arg1: memref<1x8x256xf32, #tpu.memory_space<vmem>>, %arg2: memref<4x8xbf16, #tpu.memory_space<vmem>>, %arg3: memref<4x1xf32, #tpu.memory_space<vmem>>, %arg4: memref<8x36xbf16, #tpu.memory_space<vmem>>, %arg5: memref<8x1xf32, #tpu.memory_space<vmem>>, %arg6: memref<9x256xf32, #tpu.memory_space<vmem>>, %arg7: memref<1x8x256xf32, #tpu.memory_space<vmem>>) attributes {dimension_semantics = [#tpu.dimension_semantics<parallel>], iteration_bounds = array<i64: 2>, scalar_prefetch = 0 : i64, scratch_operands = 0 : i64, tpu.core_type = #tpu.core_type<tc>, window_params = [{transform_indices = @transform_0, window_bounds = array<i64: 1, 8, 256>}, {pipeline_mode = #tpu.pipeline_mode<synchronous>, transform_indices = @transform_1, window_bounds = array<i64: 4, 8>}, {pipeline_mode = #tpu.pipeline_mode<synchronous>, transform_indices = @transform_2, window_bounds = array<i64: 4, 1>}, {pipeline_mode = #tpu.pipeline_mode<synchronous>, transform_indices = @transform_3, window_bounds = array<i64: 8, 36>}, {pipeline_mode = #tpu.pipeline_mode<synchronous>, transform_indices = @transform_4, window_bounds = array<i64: 8, 1>}, {pipeline_mode = #tpu.pipeline_mode<synchronous>, transform_indices = @transform_5, window_bounds = array<i64: 9, 256>}, {transform_indices = @transform_6, window_bounds = array<i64: 1, 8, 256>}]} {
    %c0 = arith.constant 0 : index
    %c0_0 = arith.constant 0 : index
    %0 = vector.load %arg2[%c0, %c0_0] : memref<4x8xbf16, #tpu.memory_space<vmem>>, vector<4x8xbf16>
    %c0_1 = arith.constant 0 : index
    %c0_2 = arith.constant 0 : index
    %1 = vector.load %arg3[%c0_1, %c0_2] : memref<4x1xf32, #tpu.memory_space<vmem>>, vector<4x1xf32>
    %c0_3 = arith.constant 0 : index
    %c0_4 = arith.constant 0 : index
    %2 = vector.load %arg4[%c0_3, %c0_4] : memref<8x36xbf16, #tpu.memory_space<vmem>>, vector<8x36xbf16>
    %c0_5 = arith.constant 0 : index
    %c0_6 = arith.constant 0 : index
    %3 = vector.load %arg5[%c0_5, %c0_6] : memref<8x1xf32, #tpu.memory_space<vmem>>, vector<8x1xf32>
    %c0_7 = arith.constant 0 : index
    %c0_8 = arith.constant 0 : index
    %4 = vector.load %arg6[%c0_7, %c0_8] : memref<9x256xf32, #tpu.memory_space<vmem>>, vector<9x256xf32>
    %c0_9 = arith.constant 0 : index
    %c0_10 = arith.constant 0 : index
    %c0_11 = arith.constant 0 : index
    %5 = vector.load %arg1[%c0_9, %c0_10, %c0_11] : memref<1x8x256xf32, #tpu.memory_space<vmem>>, vector<1x8x256xf32>
    %6 = vector.shape_cast %5 : vector<1x8x256xf32> to vector<8x256xf32>
    %7 = arith.truncf %6 : vector<8x256xf32> to vector<8x256xbf16>
    %cst = arith.constant dense<0.000000e+00> : vector<4x256xf32>
    %8 = tpu.matmul %0, %7, %cst {dimension_numbers = #tpu.dot_dimension_numbers<[1], [0], [0], [1], [0, 0, 1, 1], [], []>} : vector<4x8xbf16>, vector<8x256xbf16>, vector<4x256xf32> -> vector<4x256xf32>
    %9 = vector.broadcast %1 : vector<4x1xf32> to vector<4x256xf32>
    %10 = arith.addf %8, %9 : vector<4x256xf32>
    %cst_12 = arith.constant 1.000000e-01 : f32
    %11 = vector.broadcast %cst_12 : f32 to vector<4x256xf32>
    %12 = arith.mulf %11, %10 : vector<4x256xf32>
    %13 = arith.maximumf %10, %12 : vector<4x256xf32>
    %c17_i32 = arith.constant 17 : i32
    %14 = tpu.dynamic_rotate %13 by %c17_i32 dim 1 : vector<4x256xf32>, i32 -> vector<4x256xf32>
    %15 = vector.extract_strided_slice %4 {offsets = [0, 0], sizes = [1, 256], strides = [1, 1]} : vector<9x256xf32> to vector<1x256xf32>
    %16 = vector.shape_cast %15 : vector<1x256xf32> to vector<256xf32>
    %17 = vector.shape_cast %16 : vector<256xf32> to vector<1x256xf32>
    %18 = vector.broadcast %17 : vector<1x256xf32> to vector<4x256xf32>
    %19 = arith.mulf %14, %18 : vector<4x256xf32>
    %20 = arith.truncf %19 : vector<4x256xf32> to vector<4x256xbf16>
    %c16_i32 = arith.constant 16 : i32
    %21 = tpu.dynamic_rotate %13 by %c16_i32 dim 1 : vector<4x256xf32>, i32 -> vector<4x256xf32>
    %22 = vector.extract_strided_slice %4 {offsets = [1, 0], sizes = [1, 256], strides = [1, 1]} : vector<9x256xf32> to vector<1x256xf32>
    %23 = vector.shape_cast %22 : vector<1x256xf32> to vector<256xf32>
    %24 = vector.shape_cast %23 : vector<256xf32> to vector<1x256xf32>
    %25 = vector.broadcast %24 : vector<1x256xf32> to vector<4x256xf32>
    %26 = arith.mulf %21, %25 : vector<4x256xf32>
    %27 = arith.truncf %26 : vector<4x256xf32> to vector<4x256xbf16>
    %c15_i32 = arith.constant 15 : i32
    %28 = tpu.dynamic_rotate %13 by %c15_i32 dim 1 : vector<4x256xf32>, i32 -> vector<4x256xf32>
    %29 = vector.extract_strided_slice %4 {offsets = [2, 0], sizes = [1, 256], strides = [1, 1]} : vector<9x256xf32> to vector<1x256xf32>
    %30 = vector.shape_cast %29 : vector<1x256xf32> to vector<256xf32>
    %31 = vector.shape_cast %30 : vector<256xf32> to vector<1x256xf32>
    %32 = vector.broadcast %31 : vector<1x256xf32> to vector<4x256xf32>
    %33 = arith.mulf %28, %32 : vector<4x256xf32>
    %34 = arith.truncf %33 : vector<4x256xf32> to vector<4x256xbf16>
    %c1_i32 = arith.constant 1 : i32
    %35 = tpu.dynamic_rotate %13 by %c1_i32 dim 1 : vector<4x256xf32>, i32 -> vector<4x256xf32>
    %36 = vector.extract_strided_slice %4 {offsets = [3, 0], sizes = [1, 256], strides = [1, 1]} : vector<9x256xf32> to vector<1x256xf32>
    %37 = vector.shape_cast %36 : vector<1x256xf32> to vector<256xf32>
    %38 = vector.shape_cast %37 : vector<256xf32> to vector<1x256xf32>
    %39 = vector.broadcast %38 : vector<1x256xf32> to vector<4x256xf32>
    %40 = arith.mulf %35, %39 : vector<4x256xf32>
    %41 = arith.truncf %40 : vector<4x256xf32> to vector<4x256xbf16>
    %42 = arith.truncf %13 : vector<4x256xf32> to vector<4x256xbf16>
    %c255_i32 = arith.constant 255 : i32
    %43 = tpu.dynamic_rotate %13 by %c255_i32 dim 1 : vector<4x256xf32>, i32 -> vector<4x256xf32>
    %44 = vector.extract_strided_slice %4 {offsets = [5, 0], sizes = [1, 256], strides = [1, 1]} : vector<9x256xf32> to vector<1x256xf32>
    %45 = vector.shape_cast %44 : vector<1x256xf32> to vector<256xf32>
    %46 = vector.shape_cast %45 : vector<256xf32> to vector<1x256xf32>
    %47 = vector.broadcast %46 : vector<1x256xf32> to vector<4x256xf32>
    %48 = arith.mulf %43, %47 : vector<4x256xf32>
    %49 = arith.truncf %48 : vector<4x256xf32> to vector<4x256xbf16>
    %c241_i32 = arith.constant 241 : i32
    %50 = tpu.dynamic_rotate %13 by %c241_i32 dim 1 : vector<4x256xf32>, i32 -> vector<4x256xf32>
    %51 = vector.extract_strided_slice %4 {offsets = [6, 0], sizes = [1, 256], strides = [1, 1]} : vector<9x256xf32> to vector<1x256xf32>
    %52 = vector.shape_cast %51 : vector<1x256xf32> to vector<256xf32>
    %53 = vector.shape_cast %52 : vector<256xf32> to vector<1x256xf32>
    %54 = vector.broadcast %53 : vector<1x256xf32> to vector<4x256xf32>
    %55 = arith.mulf %50, %54 : vector<4x256xf32>
    %56 = arith.truncf %55 : vector<4x256xf32> to vector<4x256xbf16>
    %c240_i32 = arith.constant 240 : i32
    %57 = tpu.dynamic_rotate %13 by %c240_i32 dim 1 : vector<4x256xf32>, i32 -> vector<4x256xf32>
    %58 = vector.extract_strided_slice %4 {offsets = [7, 0], sizes = [1, 256], strides = [1, 1]} : vector<9x256xf32> to vector<1x256xf32>
    %59 = vector.shape_cast %58 : vector<1x256xf32> to vector<256xf32>
    %60 = vector.shape_cast %59 : vector<256xf32> to vector<1x256xf32>
    %61 = vector.broadcast %60 : vector<1x256xf32> to vector<4x256xf32>
    %62 = arith.mulf %57, %61 : vector<4x256xf32>
    %63 = arith.truncf %62 : vector<4x256xf32> to vector<4x256xbf16>
    %c239_i32 = arith.constant 239 : i32
    %64 = tpu.dynamic_rotate %13 by %c239_i32 dim 1 : vector<4x256xf32>, i32 -> vector<4x256xf32>
    %65 = vector.extract_strided_slice %4 {offsets = [8, 0], sizes = [1, 256], strides = [1, 1]} : vector<9x256xf32> to vector<1x256xf32>
    %66 = vector.shape_cast %65 : vector<1x256xf32> to vector<256xf32>
    %67 = vector.shape_cast %66 : vector<256xf32> to vector<1x256xf32>
    %68 = vector.broadcast %67 : vector<1x256xf32> to vector<4x256xf32>
    %69 = arith.mulf %64, %68 : vector<4x256xf32>
    %70 = arith.truncf %69 : vector<4x256xf32> to vector<4x256xbf16>
    %71 = tpu.concatenate %20, %27, %34, %41, %42, %49, %56, %63, %70 in 0 : vector<4x256xbf16>, vector<4x256xbf16>, vector<4x256xbf16>, vector<4x256xbf16>, vector<4x256xbf16>, vector<4x256xbf16>, vector<4x256xbf16>, vector<4x256xbf16>, vector<4x256xbf16> -> vector<36x256xbf16>
    %cst_13 = arith.constant dense<0.000000e+00> : vector<8x256xf32>
    %72 = tpu.matmul %2, %71, %cst_13 {dimension_numbers = #tpu.dot_dimension_numbers<[1], [0], [0], [1], [0, 0, 1, 1], [], []>} : vector<8x36xbf16>, vector<36x256xbf16>, vector<8x256xf32> -> vector<8x256xf32>
    %73 = vector.broadcast %3 : vector<8x1xf32> to vector<8x256xf32>
    %74 = arith.addf %72, %73 : vector<8x256xf32>
    %cst_14 = arith.constant 1.000000e-01 : f32
    %75 = vector.broadcast %cst_14 : f32 to vector<8x256xf32>
    %76 = arith.mulf %75, %74 : vector<8x256xf32>
    %77 = arith.maximumf %74, %76 : vector<8x256xf32>
    %78 = arith.addf %77, %6 : vector<8x256xf32>
    %c0_15 = arith.constant 0 : index
    %c0_16 = arith.constant 0 : index
    %c0_17 = arith.constant 0 : index
    %79 = vector.load %arg7[%c0_15, %c0_16, %c0_17] : memref<1x8x256xf32, #tpu.memory_space<vmem>>, vector<1x8x256xf32>
    %80 = vector.shape_cast %79 : vector<1x8x256xf32> to vector<8x256xf32>
    %81 = vector.shape_cast %78 : vector<8x256xf32> to vector<1x8x256xf32>
    tpu.vector_store %arg7[%c0_15, %c0_16, %c0_17], %81 {strides = array<i32>} : memref<1x8x256xf32, #tpu.memory_space<vmem>>, vector<1x8x256xf32>,
    return
  }
  func.func @transform_0(%arg0: i32) -> (i32, i32, i32) {
    %c0_i32 = arith.constant 0 : i32
    %c0_i32_0 = arith.constant 0 : i32
    %c0_i32_1 = arith.constant 0 : i32
    return %arg0, %c0_i32, %c0_i32_0 : i32, i32, i32
  }
  func.func @transform_1(%arg0: i32) -> (i32, i32) {
    %c0_i32 = arith.constant 0 : i32
    %c0_i32_0 = arith.constant 0 : i32
    %c0_i32_1 = arith.constant 0 : i32
    return %c0_i32, %c0_i32_0 : i32, i32
  }
  func.func @transform_2(%arg0: i32) -> (i32, i32) {
    %c0_i32 = arith.constant 0 : i32
    %c0_i32_0 = arith.constant 0 : i32
    %c0_i32_1 = arith.constant 0 : i32
    return %c0_i32, %c0_i32_0 : i32, i32
  }
  func.func @transform_3(%arg0: i32) -> (i32, i32) {
    %c0_i32 = arith.constant 0 : i32
    %c0_i32_0 = arith.constant 0 : i32
    %c0_i32_1 = arith.constant 0 : i32
    return %c0_i32, %c0_i32_0 : i32, i32
  }
  func.func @transform_4(%arg0: i32) -> (i32, i32) {
    %c0_i32 = arith.constant 0 : i32
    %c0_i32_0 = arith.constant 0 : i32
    %c0_i32_1 = arith.constant 0 : i32
    return %c0_i32, %c0_i32_0 : i32, i32
  }
  func.func @transform_5(%arg0: i32) -> (i32, i32) {
    %c0_i32 = arith.constant 0 : i32
    %c0_i32_0 = arith.constant 0 : i32
    %c0_i32_1 = arith.constant 0 : i32
    return %c0_i32, %c0_i32_0 : i32, i32
  }
  func.func @transform_6(%arg0: i32) -> (i32, i32, i32) {
    %c0_i32 = arith.constant 0 : i32
    %c0_i32_0 = arith.constant 0 : i32
    %c0_i32_1 = arith.constant 0 : i32
    return %arg0, %c0_i32, %c0_i32_0 : i32, i32, i32
  }
}

</mosaic_0001>

<llo_original>
// kernel: tpu_custom_call.1
$region0: #{tpu_custom_call.1}
  #allocation0 [shape = 'u32[]', space=smem, size = 0x4, offset = 0x4, fixed_abs, tag = 'smem constant byte address 0x4 - core index']
  #allocation1 [shape = 'u32[144,128]{1,0:T(1,128)}', space=vmem, size = 0x12000, scoped, tag = 'internal scratch']
  %s0 = inlined_call_operand.hbm [shape: f32[2,8,256], index: 0, kind: input, shape index: {}]
  %s1 = inlined_call_operand.hbm [shape: bf16[4,8], index: 1, kind: input, shape index: {}]
  %s2 = inlined_call_operand.vmem [shape: f32[4,1], index: 2, kind: input, shape index: {}]
  %s3 = inlined_call_operand.hbm [shape: bf16[8,36], index: 3, kind: input, shape index: {}]
  %s4 = inlined_call_operand.vmem [shape: f32[8,1], index: 4, kind: input, shape index: {}]
  %s5 = inlined_call_operand.vmem [shape: f32[9,256], index: 5, kind: input, shape index: {}]
  %s6 = inlined_call_operand.hbm [shape: f32[2,8,256], index: 6, kind: output, shape index: {}]
  %s7 = sld [smem:[#allocation0]]
  $region69: #{tpu_custom_call.1} parent=0
    _
  %s9 = ssub.s32 1, %s7
  %s10 = scalar_select 0, %s9, %s7
  $region1: #{tpu_custom_call.1} parent=0
    #allocation2 [shape = 'u8[16384]{0}', space=vmem, size = 0x4000, scoped, tag = 'input window, operand 0']
    #allocation3 [shape = 's32[2]{0}', space=sflag, size = 0x8, scoped, tag = 'scoped memory for tpu_custom_call.1']
    #allocation4 [shape = 's32[2]{0}', space=sflag, size = 0x8, scoped, tag = 'scoped memory for tpu_custom_call.1']
    #allocation5 [shape = 'u8[1024]{0}', space=vmem, size = 0x400, scoped, tag = 'input window, operand 1, single buffered']
    #allocation6 [shape = 's32[1]{0}', space=sflag, size = 0x4, scoped, tag = 'scoped memory for tpu_custom_call.1']
    #allocation7 [shape = 'u8[2048]{0}', space=vmem, size = 0x800, scoped, tag = 'input window, operand 3, single buffered']
    #allocation8 [shape = 'u8[16384]{0}', space=vmem, size = 0x4000, scoped, tag = 'output window, operand 0']
    %11 = vsyncpa [#allocation3], 0
    %s12 = scalar_lea.sflag [#allocation3], 1
    %13 = vsyncpa %s12, 0
    %14 = vsyncpa [#allocation6], 0
    %15 = vsyncpa [#allocation4], 0
    %s16 = scalar_lea.sflag [#allocation4], 1
    %17 = vsyncpa %s16, 0
    loop: start=0, step=1, limit=4
    $region2: #{tpu_custom_call.1} parent=1 // loop_pre_header
      _
    $region3: #{tpu_custom_call.1} parent=1 // loop_header
      %s19 = sphi 0, %s23
      %p20 = scmp.ge.s32.totalorder %s19, 4
      %s29 = sphi 0, %s31
      %s32 = sphi 0, %s29
      %s33 = sphi 0, %s32
      %s49 = sphi 0, %s33
      %s53 = sphi 0, %s53
      %s55 = sphi 0, %s53
      %s56 = sphi 0, %s55
      %s70 = sphi 0, %s56
      %s74 = sphi 0, %s74
      %s76 = sphi 0, %s74
      %s77 = sphi 0, %s76
      %s91 = sphi 0, %s77
      %s95 = sphi 0, %s95
      %s97 = sphi 0, %s95
      %s98 = sphi 0, %s97
      %s112 = sphi 0, %s98
      %s116 = sphi 0, %s116
      %s118 = sphi 0, %s116
      %s119 = sphi 0, %s118
      %s133 = sphi 0, %s119
      %s137 = sphi 0, %s137
      %s139 = sphi 0, %s137
      %s140 = sphi 0, %s139
      %s154 = sphi 0, %s140
      %s160 = sphi 0, %s162
      %s163 = sphi 0, %s160
      %s164 = sphi 0, %s163
      %s180 = sphi 0, %s164
    $region4: #{tpu_custom_call.1} parent=1 // loop_header_branch
      %22 = sbr.rel (%p20) target = $region8
    $region5: #{tpu_custom_call.1} parent=1 // loop_body
      %s24 = ssub.s32 %s19, 1
      %s25 = ssub.s32 %s19, 2
      %s26 = sadd.s32 %s19, 1
      %s27 = ssub.s32 %s19, %s26
      %p28 = scmp.eq.s32.totalorder %s27, 0
      %s30 = sadd.s32 %s29, 1
      %s31 = scalar_select %p28, %s29, %s30
      %p34 = pneg %p28
      %p35 = scmp.eq.s32.totalorder %s19, 1
      %p36 = por %p34, %p35
      %p37 = scmp.ne.s32.totalorder %s29, %s32
      %p38 = scmp.eq.s32.totalorder %s19, 0
      %p39 = por %p37, %p38
      %p40 = scmp.ne.s32.totalorder %s29, %s32
      %p41 = scmp.eq.s32.totalorder %s24, 1
      %p42 = por %p40, %p41
      %p43 = scmp.ne.s32.totalorder %s32, %s33
      %p44 = scmp.eq.s32.totalorder %s24, 0
      %p45 = por %p43, %p44
      %p46 = scmp.ne.s32.totalorder %s32, %s33
      %p47 = scmp.eq.s32.totalorder %s25, 1
      %p48 = por %p46, %p47
      %p50 = scmp.ne.s32.totalorder %s33, %s49
      %p51 = scmp.eq.s32.totalorder %s25, 0
      %p52 = por %p50, %p51
      %s54 = sadd.s32 %s53, 1
      %p57 = scmp.eq.s32.totalorder %s19, 1
      %p58 = scmp.ne.s32.totalorder %s53, %s55
      %p59 = scmp.eq.s32.totalorder %s19, 0
      %p60 = por %p58, %p59
      %p61 = scmp.ne.s32.totalorder %s53, %s55
      %p62 = scmp.eq.s32.totalorder %s24, 1
      %p63 = por %p61, %p62
      %p64 = scmp.ne.s32.totalorder %s55, %s56
      %p65 = scmp.eq.s32.totalorder %s24, 0
      %p66 = por %p64, %p65
      %p67 = scmp.ne.s32.totalorder %s55, %s56
      %p68 = scmp.eq.s32.totalorder %s25, 1
      %p69 = por %p67, %p68
      %p71 = scmp.ne.s32.totalorder %s56, %s70
      %p72 = scmp.eq.s32.totalorder %s25, 0
      %p73 = por %p71, %p72
      %s75 = sadd.s32 %s74, 1
      %p78 = scmp.eq.s32.totalorder %s19, 1
      %p79 = scmp.ne.s32.totalorder %s74, %s76
      %p80 = scmp.eq.s32.totalorder %s19, 0
      %p81 = por %p79, %p80
      %p82 = scmp.ne.s32.totalorder %s74, %s76
      %p83 = scmp.eq.s32.totalorder %s24, 1
      %p84 = por %p82, %p83
      %p85 = scmp.ne.s32.totalorder %s76, %s77
      %p86 = scmp.eq.s32.totalorder %s24, 0
      %p87 = por %p85, %p86
      %p88 = scmp.ne.s32.totalorder %s76, %s77
      %p89 = scmp.eq.s32.totalorder %s25, 1
      %p90 = por %p88, %p89
      %p92 = scmp.ne.s32.totalorder %s77, %s91
      %p93 = scmp.eq.s32.totalorder %s25, 0
      %p94 = por %p92, %p93
      %s96 = sadd.s32 %s95, 1
      %p99 = scmp.eq.s32.totalorder %s19, 1
      %p100 = scmp.ne.s32.totalorder %s95, %s97
      %p101 = scmp.eq.s32.totalorder %s19, 0
      %p102 = por %p100, %p101
      %p103 = scmp.ne.s32.totalorder %s95, %s97
      %p104 = scmp.eq.s32.totalorder %s24, 1
      %p105 = por %p103, %p104
      %p106 = scmp.ne.s32.totalorder %s97, %s98
      %p107 = scmp.eq.s32.totalorder %s24, 0
      %p108 = por %p106, %p107
      %p109 = scmp.ne.s32.totalorder %s97, %s98
      %p110 = scmp.eq.s32.totalorder %s25, 1
      %p111 = por %p109, %p110
      %p113 = scmp.ne.s32.totalorder %s98, %s112
      %p114 = scmp.eq.s32.totalorder %s25, 0
      %p115 = por %p113, %p114
      %s117 = sadd.s32 %s116, 1
      %p120 = scmp.eq.s32.totalorder %s19, 1
      %p121 = scmp.ne.s32.totalorder %s116, %s118
      %p122 = scmp.eq.s32.totalorder %s19, 0
      %p123 = por %p121, %p122
      %p124 = scmp.ne.s32.totalorder %s116, %s118
      %p125 = scmp.eq.s32.totalorder %s24, 1
      %p126 = por %p124, %p125
      %p127 = scmp.ne.s32.totalorder %s118, %s119
      %p128 = scmp.eq.s32.totalorder %s24, 0
      %p129 = por %p127, %p128
      %p130 = scmp.ne.s32.totalorder %s118, %s119
      %p131 = scmp.eq.s32.totalorder %s25, 1
      %p132 = por %p130, %p131
      %p134 = scmp.ne.s32.totalorder %s119, %s133
      %p135 = scmp.eq.s32.totalorder %s25, 0
      %p136 = por %p134, %p135
      %s138 = sadd.s32 %s137, 1
      %p141 = scmp.eq.s32.totalorder %s19, 1
      %p142 = scmp.ne.s32.totalorder %s137, %s139
      %p143 = scmp.eq.s32.totalorder %s19, 0
      %p144 = por %p142, %p143
      %p145 = scmp.ne.s32.totalorder %s137, %s139
      %p146 = scmp.eq.s32.totalorder %s24, 1
      %p147 = por %p145, %p146
      %p148 = scmp.ne.s32.totalorder %s139, %s140
      %p149 = scmp.eq.s32.totalorder %s24, 0
      %p150 = por %p148, %p149
      %p151 = scmp.ne.s32.totalorder %s139, %s140
      %p152 = scmp.eq.s32.totalorder %s25, 1
      %p153 = por %p151, %p152
      %p155 = scmp.ne.s32.totalorder %s140, %s154
      %p156 = scmp.eq.s32.totalorder %s25, 0
      %p157 = por %p155, %p156
      %s158 = ssub.s32 %s19, %s26
      %p159 = scmp.eq.s32.totalorder %s158, 0
      %s161 = sadd.s32 %s160, 1
      %s162 = scalar_select %p159, %s160, %s161
      %p165 = pneg %p159
      %p166 = scmp.eq.s32.totalorder %s19, 1
      %p167 = por %p165, %p166
      %p168 = scmp.ne.s32.totalorder %s160, %s163
      %p169 = scmp.eq.s32.totalorder %s19, 0
      %p170 = por %p168, %p169
      %p171 = scmp.ne.s32.totalorder %s160, %s163
      %p172 = scmp.eq.s32.totalorder %s24, 1
      %p173 = por %p171, %p172
      %p174 = scmp.ne.s32.totalorder %s163, %s164
      %p175 = scmp.eq.s32.totalorder %s24, 0
      %p176 = por %p174, %p175
      %p177 = scmp.ne.s32.totalorder %s163, %s164
      %p178 = scmp.eq.s32.totalorder %s25, 1
      %p179 = por %p177, %p178
      %p181 = scmp.ne.s32.totalorder %s164, %s180
      %p182 = scmp.eq.s32.totalorder %s25, 0
      %p183 = por %p181, %p182
      %p184 = scmp.le.s32.totalorder 1, %s19
      %p185 = scmp.lt.s32.totalorder %s19, 3
      %p186 = pnand %p184, %p185
      %p187 = pneg %p186
      // Predicated region
      $region9: #{tpu_custom_call.1} parent=5 // pred_check
        _
      $region10: #{tpu_custom_call.1} parent=5 // pred_check_branch
        %189 = sbr.rel (%p186) target = $region12
      $region11: #{tpu_custom_call.1} parent=5 // pred_region
        %s190 = ssub.s32 %s19, 1
        // Predicated region
        $region13: #{tpu_custom_call.1} parent=11 // pred_check
          %p191 = pneg %p66
        $region14: #{tpu_custom_call.1} parent=11 // pred_check_branch
          %193 = sbr.rel (%p191) target = $region16
        $region15: #{tpu_custom_call.1} parent=11 // pred_region
          %s195 = ssub.s32 32, 32
          %196 = vsyncadd [#allocation6], %s195
          %s198 = sshll.u32 [#allocation5], 4
          %s199 = int_to_ptr.vmem [resolvable:$true] %s198
          %201 = dma.hbm_to_vmem [thread:$0]  %s1, 32, %s199, [#allocation6]
        $region16: #{tpu_custom_call.1} parent=11 // pred_fallthru
          _
        // Predicated region
        $region17: #{tpu_custom_call.1} parent=11 // pred_check
          %p202 = pneg %p87
        $region18: #{tpu_custom_call.1} parent=11 // pred_check_branch
          %204 = sbr.rel (%p202) target = $region20
        $region19: #{tpu_custom_call.1} parent=11 // pred_region
          _
        $region20: #{tpu_custom_call.1} parent=11 // pred_fallthru
          _
        // Predicated region
        $region21: #{tpu_custom_call.1} parent=11 // pred_check
          %p205 = pneg %p108
        $region22: #{tpu_custom_call.1} parent=11 // pred_check_branch
          %207 = sbr.rel (%p205) target = $region24
        $region23: #{tpu_custom_call.1} parent=11 // pred_region
          %s209 = ssub.s32 64, 64
          %210 = vsyncadd [#allocation6], %s209
          %s212 = sshll.u32 [#allocation7], 4
          %s213 = int_to_ptr.vmem [resolvable:$true] %s212
          %215 = dma.hbm_to_vmem [thread:$0]  %s3, 64, %s213, [#allocation6]
        $region24: #{tpu_custom_call.1} parent=11 // pred_fallthru
          _
        // Predicated region
        $region25: #{tpu_custom_call.1} parent=11 // pred_check
          %p216 = pneg %p129
        $region26: #{tpu_custom_call.1} parent=11 // pred_check_branch
          %218 = sbr.rel (%p216) target = $region28
        $region27: #{tpu_custom_call.1} parent=11 // pred_region
          _
        $region28: #{tpu_custom_call.1} parent=11 // pred_fallthru
          _
        // Predicated region
        $region29: #{tpu_custom_call.1} parent=11 // pred_check
          %p219 = pneg %p150
        $region30: #{tpu_custom_call.1} parent=11 // pred_check_branch
          %221 = sbr.rel (%p219) target = $region32
        $region31: #{tpu_custom_call.1} parent=11 // pred_region
          _
        $region32: #{tpu_custom_call.1} parent=11 // pred_fallthru
          _
      $region12: #{tpu_custom_call.1} parent=5 // pred_fallthru
        _
      %p222 = scmp.lt.s32.totalorder %s19, 2
      // Predicated region
      $region33: #{tpu_custom_call.1} parent=5 // pred_check
        %p223 = pneg %p222
      $region34: #{tpu_custom_call.1} parent=5 // pred_check_branch
        %225 = sbr.rel (%p223) target = $region36
      $region35: #{tpu_custom_call.1} parent=5 // pred_region
        // Predicated region
        $region37: #{tpu_custom_call.1} parent=35 // pred_check
          %p226 = pneg %p39
        $region38: #{tpu_custom_call.1} parent=35 // pred_check_branch
          %228 = sbr.rel (%p226) target = $region40
        $region39: #{tpu_custom_call.1} parent=35 // pred_region
          %s229 = sand.u32 %s29, 1
          %s230 = scalar_lea.sflag [#allocation3], %s229
          %s231 = sand.u32 %s29, 1
          %s232 = smul.addr %s231, 16
          %s233 = scalar_lea.vmem [#allocation2], %s232
          %s235 = ssub.s32 256, 256
          %236 = vsyncadd %s230, %s235
          %s237 = smul.addr %s19, 2
          %s238 = smul.addr %s237, 128
          %s239 = scalar_lea.hbm %s0, %s238
          %s241 = sshll.u32 %s233, 4
          %s242 = int_to_ptr.vmem [resolvable:$true] %s241
          %244 = dma.hbm_to_vmem [thread:$0]  %s239, 256, %s242, %s230
        $region40: #{tpu_custom_call.1} parent=35 // pred_fallthru
          _
      $region36: #{tpu_custom_call.1} parent=5 // pred_fallthru
        _
      %p245 = scmp.le.s32.totalorder 1, %s19
      %p246 = scmp.lt.s32.totalorder %s19, 3
      %p247 = pnand %p245, %p246
      %p248 = pneg %p247
      // Predicated region
      $region41: #{tpu_custom_call.1} parent=5 // pred_check
        _
      $region42: #{tpu_custom_call.1} parent=5 // pred_check_branch
        %250 = sbr.rel (%p247) target = $region44
      $region43: #{tpu_custom_call.1} parent=5 // pred_region
        %s251 = ssub.s32 %s19, 1
        %s252 = sand.u32 %s32, 1
        %s253 = scalar_lea.sflag [#allocation3], %s252
        %s254 = sand.u32 %s32, 1
        %s255 = smul.addr %s254, 16
        %s256 = scalar_lea.vmem [#allocation2], %s255
        // Predicated region
        $region45: #{tpu_custom_call.1} parent=43 // pred_check
          %p257 = pneg %p45
        $region46: #{tpu_custom_call.1} parent=43 // pred_check_branch
          %259 = sbr.rel (%p257) target = $region48
        $region47: #{tpu_custom_call.1} parent=43 // pred_region
          %260 = dma.done %s253, 256
        $region48: #{tpu_custom_call.1} parent=43 // pred_fallthru
          _
        // Predicated region
        $region49: #{tpu_custom_call.1} parent=43 // pred_check
          %p261 = pneg %p66
        $region50: #{tpu_custom_call.1} parent=43 // pred_check_branch
          %263 = sbr.rel (%p261) target = $region52
        $region51: #{tpu_custom_call.1} parent=43 // pred_region
          %264 = dma.done [#allocation6], 32
        $region52: #{tpu_custom_call.1} parent=43 // pred_fallthru
          _
        // Predicated region
        $region53: #{tpu_custom_call.1} parent=43 // pred_check
          %p265 = pneg %p108
        $region54: #{tpu_custom_call.1} parent=43 // pred_check_branch
          %267 = sbr.rel (%p265) target = $region56
        $region55: #{tpu_custom_call.1} parent=43 // pred_region
          %268 = dma.done [#allocation6], 64
        $region56: #{tpu_custom_call.1} parent=43 // pred_fallthru
          _
        %s269 = sand.u32 %s32, 1
        %s270 = scalar_lea.sflag [#allocation3], %s269
        %s271 = sand.u32 %s32, 1
        %s272 = smul.addr %s271, 16
        %s273 = scalar_lea.vmem [#allocation2], %s272
        %p274 = pneg %p45
        %p275 = pneg %p42
        %p276 = pneg %p66
        %p277 = pneg %p63
        %p278 = pneg %p87
        %p279 = pneg %p84
        %p280 = pneg %p108
        %p281 = pneg %p105
        %p282 = pneg %p129
        %p283 = pneg %p126
        %p284 = pneg %p150
        %p285 = pneg %p147
        %p286 = pneg %p176
        %p287 = pneg %p173
        %s288 = sand.u32 %s163, 1
        %s289 = scalar_lea.sflag [#allocation4], %s288
        %s290 = sand.u32 %s163, 1
        %s291 = smul.addr %s290, 16
        %s292 = scalar_lea.vmem [#allocation8], %s291
        %v294 = vld [vmem:[#allocation5] sm:$0x3]
        %v295 = vld [vmem:[%s2] sm:$0xf]
        %v296 = vld [vmem:[#allocation7] sm:$0xf]
        %v297 = vld [vmem:[%s4] sm:$0xff]
        %v298 = vld [vmem:[%s5] sm:$0xff]
        %v299 = vld [vmem:[%s5 + $0x8] sm:$0xff]
        %v300 = vld [vmem:[%s5 + $0x10] sm:$0x1]
        %v301 = vld [vmem:[%s5 + $0x18] sm:$0x1]
        %v302 = vld [vmem:[%s256] sm:$0xff]
        %v303 = vld [vmem:[%s256 + $0x8] sm:$0xff]
        %v304 = vpack.c.bf16 %v302, %v302
        %v305 = vpack.c.bf16 %v303, %v303
        %307 = vset.pattern.permute.xlu0 0
        %308 = vperm.xlu0 %307, %v295
        %v309 = vpop.permute.xlu0 %308
        %vm311 = vcmask 64512
        %v313 = vsel %vm311, %v294, 0
        %vm315 = vcmask 1043456
        %v317 = vsel %vm315, %v304, 0
        %v320 = vsel %vm315, %v305, 0
        %322 = vmatprep.subr.bf16.mxu0 %v320
        %323 = vmatpush1.bf16.msra.mxu0 %v317
        %324 = vmatprep.subr.bf16.mxu0 0
        %325 = vmatpush1.bf16.msra.mxu0 0
        %326 = vmatprep.subr.bf16.mxu0 0
        %327 = vmatpush1.bf16.msra.mxu0 0
        %328 = vmatprep.subr.bf16.mxu0 0
        %329 = vmatpush1.bf16.msra.mxu0 0
        %330 = vmatprep.subr.bf16.mxu0 0
        %331 = vmatpush1.bf16.msra.mxu0 0
        %332 = vmatprep.subr.bf16.mxu0 0
        %333 = vmatpush1.bf16.msra.mxu0 0
        %334 = vmatprep.subr.bf16.mxu0 0
        %335 = vmatpush1.bf16.msra.mxu0 0
        %336 = vmatprep.subr.bf16.mxu0 0
        %337 = vmatpush1.bf16.msra.mxu0 0
        %338 = vmatprep.subr.bf16.mxu0 0
        %339 = vmatpush1.bf16.msra.mxu0 0
        %340 = vmatprep.subr.bf16.mxu0 0
        %341 = vmatpush1.bf16.msra.mxu0 0
        %342 = vmatprep.subr.bf16.mxu0 0
        %343 = vmatpush1.bf16.msra.mxu0 0
        %344 = vmatprep.subr.bf16.mxu0 0
        %345 = vmatpush1.bf16.msra.mxu0 0
        %346 = vmatprep.subr.bf16.mxu0 0
        %347 = vmatpush1.bf16.msra.mxu0 0
        %348 = vmatprep.subr.bf16.mxu0 0
        %349 = vmatpush1.bf16.msra.mxu0 0
        %350 = vmatprep.subr.bf16.mxu0 0
        %351 = vmatpush1.bf16.msra.mxu0 0
        %352 = vmatprep.subr.bf16.mxu0 0
        %353 = vmatpush1.bf16.msra.mxu0 0
        %354 = vmatprep.mubr.bf16.mxu0 0
        %355 = vmatmul.mubr.bf16.gmra.mrb[0].mxu0 %v313
        %v356 = vpop.f32.mrb[0].mxu0
        %v357 = vadd.f32 %v309, %v356
        %v358 = vpop.f32.mrb[0].mxu0
        %v359 = vadd.f32 %v309, %v358
        %v360 = vpop.f32.mrb[0].mxu0
        %v361 = vpop.f32.mrb[0].mxu0
        %362 = vdwg.mxu0
        %v363 = vmul.f32 %v357, 0.1
        %v364 = vmul.f32 %v359, 0.1
        %v365 = vmax.f32 %v357, %v363
        %v366 = vmax.f32 %v359, %v364
        %367 = vrot.lane.b32.xlu0 %v365, 17
        %v368 = vpop.permute.xlu0 %367
        %369 = vrot.lane.b32.xlu0 %v366, 17
        %v370 = vpop.permute.xlu0 %369
        %v371 = vlaneseq
        %v372 = vand.u32 %v371, 127
        %vm373 = vcmp.lt.s32.totalorder %v372, 17
        %v374 = vsel %vm373, %v368, %v370
        %v375 = vsel %vm373, %v370, %v368
        %v376 = vlaneseq
        %v377 = vshrl.u32 %v376, 7
        %v378 = vsub.s32 0, %v377
        %v379 = vrot.slane %v298, %v378
        %v380 = vlaneseq
        %v381 = vshrl.u32 %v380, 7
        %v382 = vsub.s32 0, %v381
        %v383 = vrot.slane %v299, %v382
        %v384 = vmul.f32 %v375, %v379
        %v385 = vmul.f32 %v374, %v383
        %v386 = vpack.c.bf16 %v384, %v384
        %v387 = vpack.c.bf16 %v385, %v385
        %388 = vrot.lane.b32.xlu0 %v365, 16
        %v389 = vpop.permute.xlu0 %388
        %390 = vrot.lane.b32.xlu0 %v366, 16
        %v391 = vpop.permute.xlu0 %390
        %vm392 = vcmp.lt.s32.totalorder %v372, 16
        %v393 = vsel %vm392, %v389, %v391
        %v394 = vsel %vm392, %v391, %v389
        %v395 = vlaneseq
        %v396 = vshrl.u32 %v395, 7
        %v397 = vsub.s32 1, %v396
        %v398 = vrot.slane %v298, %v397
        %v399 = vlaneseq
        %v400 = vshrl.u32 %v399, 7
        %v401 = vsub.s32 1, %v400
        %v402 = vrot.slane %v299, %v401
        %v403 = vmul.f32 %v394, %v398
        %v404 = vmul.f32 %v393, %v402
        %v405 = vpack.c.bf16 %v403, %v403
        %v406 = vpack.c.bf16 %v404, %v404
        %407 = vrot.lane.b32.xlu0 %v365, 15
        %v408 = vpop.permute.xlu0 %407
        %409 = vrot.lane.b32.xlu0 %v366, 15
        %v410 = vpop.permute.xlu0 %409
        %vm411 = vcmp.lt.s32.totalorder %v372, 15
        %v412 = vsel %vm411, %v408, %v410
        %v413 = vsel %vm411, %v410, %v408
        %v414 = vlaneseq
        %v415 = vshrl.u32 %v414, 7
        %v416 = vsub.s32 2, %v415
        %v417 = vrot.slane %v298, %v416
        %v418 = vlaneseq
        %v419 = vshrl.u32 %v418, 7
        %v420 = vsub.s32 2, %v419
        %v421 = vrot.slane %v299, %v420
        %v422 = vmul.f32 %v413, %v417
        %v423 = vmul.f32 %v412, %v421
        %v424 = vpack.c.bf16 %v422, %v422
        %v425 = vpack.c.bf16 %v423, %v423
        %426 = vrot.lane.b32.xlu0 %v365, 1
        %v427 = vpop.permute.xlu0 %426
        %428 = vrot.lane.b32.xlu0 %v366, 1
        %v429 = vpop.permute.xlu0 %428
        %vm430 = vcmp.lt.s32.totalorder %v372, 1
        %v431 = vsel %vm430, %v427, %v429
        %v432 = vsel %vm430, %v429, %v427
        %v433 = vlaneseq
        %v434 = vshrl.u32 %v433, 7
        %v435 = vsub.s32 3, %v434
        %v436 = vrot.slane %v298, %v435
        %v437 = vlaneseq
        %v438 = vshrl.u32 %v437, 7
        %v439 = vsub.s32 3, %v438
        %v440 = vrot.slane %v299, %v439
        %v441 = vmul.f32 %v432, %v436
        %v442 = vmul.f32 %v431, %v440
        %v443 = vpack.c.bf16 %v441, %v441
        %v444 = vpack.c.bf16 %v442, %v442
        %v445 = vpack.c.bf16 %v365, %v365
        %v446 = vpack.c.bf16 %v366, %v366
        %447 = vrot.lane.b32.xlu0 %v365, 127
        %v448 = vpop.permute.xlu0 %447
        %449 = vrot.lane.b32.xlu0 %v366, 127
        %v450 = vpop.permute.xlu0 %449
        %vm451 = vcmp.lt.s32.totalorder %v372, 127
        %v452 = vsel %vm451, %v448, %v450
        %v453 = vsel %vm451, %v450, %v448
        %v454 = vlaneseq
        %v455 = vshrl.u32 %v454, 7
        %v456 = vsub.s32 5, %v455
        %v457 = vrot.slane %v298, %v456
        %v458 = vlaneseq
        %v459 = vshrl.u32 %v458, 7
        %v460 = vsub.s32 5, %v459
        %v461 = vrot.slane %v299, %v460
        %v462 = vmul.f32 %v452, %v457
        %v463 = vmul.f32 %v453, %v461
        %v464 = vpack.c.bf16 %v462, %v462
        %v465 = vpack.c.bf16 %v463, %v463
        %466 = vrot.lane.b32.xlu0 %v365, 113
        %v467 = vpop.permute.xlu0 %466
        %468 = vrot.lane.b32.xlu0 %v366, 113
        %v469 = vpop.permute.xlu0 %468
        %vm470 = vcmp.lt.s32.totalorder %v372, 113
        %v471 = vsel %vm470, %v467, %v469
        %v472 = vsel %vm470, %v469, %v467
        %v473 = vlaneseq
        %v474 = vshrl.u32 %v473, 7
        %v475 = vsub.s32 6, %v474
        %v476 = vrot.slane %v298, %v475
        %v477 = vlaneseq
        %v478 = vshrl.u32 %v477, 7
        %v479 = vsub.s32 6, %v478
        %v480 = vrot.slane %v299, %v479
        %v481 = vmul.f32 %v471, %v476
        %v482 = vmul.f32 %v472, %v480
        %v483 = vpack.c.bf16 %v481, %v481
        %v484 = vpack.c.bf16 %v482, %v482
        %485 = vrot.lane.b32.xlu0 %v365, 112
        %v486 = vpop.permute.xlu0 %485
        %487 = vrot.lane.b32.xlu0 %v366, 112
        %v488 = vpop.permute.xlu0 %487
        %vm489 = vcmp.lt.s32.totalorder %v372, 112
        %v490 = vsel %vm489, %v486, %v488
        %v491 = vsel %vm489, %v488, %v486
        %v492 = vlaneseq
        %v493 = vshrl.u32 %v492, 7
        %v494 = vsub.s32 7, %v493
        %v495 = vrot.slane %v298, %v494
        %v496 = vlaneseq
        %v497 = vshrl.u32 %v496, 7
        %v498 = vsub.s32 7, %v497
        %v499 = vrot.slane %v299, %v498
        %v500 = vmul.f32 %v490, %v495
        %v501 = vmul.f32 %v491, %v499
        %v502 = vpack.c.bf16 %v500, %v500
        %v503 = vpack.c.bf16 %v501, %v501
        %504 = vrot.lane.b32.xlu0 %v365, 111
        %v505 = vpop.permute.xlu0 %504
        %506 = vrot.lane.b32.xlu0 %v366, 111
        %v507 = vpop.permute.xlu0 %506
        %vm508 = vcmp.lt.s32.totalorder %v372, 111
        %v509 = vsel %vm508, %v505, %v507
        %v510 = vsel %vm508, %v507, %v505
        %v511 = vlaneseq
        %v512 = vshrl.u32 %v511, 7
        %v513 = vsub.s32 0, %v512
        %v514 = vrot.slane %v300, %v513
        %v515 = vlaneseq
        %v516 = vshrl.u32 %v515, 7
        %v517 = vsub.s32 0, %v516
        %v518 = vrot.slane %v301, %v517
        %v519 = vmul.f32 %v509, %v514
        %v520 = vmul.f32 %v510, %v518
        %v521 = vpack.c.bf16 %v519, %v519
        %v522 = vpack.c.bf16 %v520, %v520
        %v525 = vrot.slane %v405, 6
        %v526 = vrot.slane %v406, 6
        %v529 = vrot.slane %v424, 4
        %v530 = vrot.slane %v425, 4
        %v533 = vrot.slane %v443, 2
        %v534 = vrot.slane %v444, 2
        %v537 = vrot.slane %v464, 6
        %v538 = vrot.slane %v465, 6
        %v541 = vrot.slane %v483, 4
        %v542 = vrot.slane %v484, 4
        %v545 = vrot.slane %v502, 2
        %v546 = vrot.slane %v503, 2
        %vm547 = vcmask 1041408
        %v550 = vsel %vm547, %v386, %v525
        %v553 = vsel %vm547, %v387, %v526
        %v555 = vsel %vm315, %v550, %v529
        %v557 = vsel %vm315, %v553, %v530
        %vm558 = vcmask 1045504
        %v560 = vsel %vm558, %v555, %v533
        %v563 = vsel %vm558, %v557, %v534
        %v567 = vsel %vm547, %v445, %v537
        %v570 = vsel %vm547, %v446, %v538
        %v572 = vsel %vm315, %v567, %v541
        %v574 = vsel %vm315, %v570, %v542
        %v576 = vsel %vm558, %v572, %v545
        %v579 = vsel %vm558, %v574, %v546
        %582 = vset.pattern.permute.xlu0 0
        %583 = vperm.xlu0 %582, %v297
        %v584 = vpop.permute.xlu0 %583
        %vm586 = vcmask 293888
        %v588 = vsel %vm586, %v296, 0
        %v591 = vsel %vm547, %v521, 0
        %v594 = vsel %vm547, %v522, 0
        %596 = vmatprep.subr.bf16.mxu0 %v563
        %597 = vmatpush1.bf16.msra.mxu0 %v560
        %598 = vmatprep.subr.bf16.mxu0 %v579
        %599 = vmatpush1.bf16.msra.mxu0 %v576
        %600 = vmatprep.subr.bf16.mxu0 %v594
        %601 = vmatpush1.bf16.msra.mxu0 %v591
        %602 = vmatprep.subr.bf16.mxu0 0
        %603 = vmatpush1.bf16.msra.mxu0 0
        %604 = vmatprep.subr.bf16.mxu0 0
        %605 = vmatpush1.bf16.msra.mxu0 0
        %606 = vmatprep.subr.bf16.mxu0 0
        %607 = vmatpush1.bf16.msra.mxu0 0
        %608 = vmatprep.subr.bf16.mxu0 0
        %609 = vmatpush1.bf16.msra.mxu0 0
        %610 = vmatprep.subr.bf16.mxu0 0
        %611 = vmatpush1.bf16.msra.mxu0 0
        %612 = vmatprep.subr.bf16.mxu0 0
        %613 = vmatpush1.bf16.msra.mxu0 0
        %614 = vmatprep.subr.bf16.mxu0 0
        %615 = vmatpush1.bf16.msra.mxu0 0
        %616 = vmatprep.subr.bf16.mxu0 0
        %617 = vmatpush1.bf16.msra.mxu0 0
        %618 = vmatprep.subr.bf16.mxu0 0
        %619 = vmatpush1.bf16.msra.mxu0 0
        %620 = vmatprep.subr.bf16.mxu0 0
        %621 = vmatpush1.bf16.msra.mxu0 0
        %622 = vmatprep.subr.bf16.mxu0 0
        %623 = vmatpush1.bf16.msra.mxu0 0
        %624 = vmatprep.subr.bf16.mxu0 0
        %625 = vmatpush1.bf16.msra.mxu0 0
        %626 = vmatprep.subr.bf16.mxu0 0
        %627 = vmatpush1.bf16.msra.mxu0 0
        %628 = vmatprep.mubr.bf16.mxu0 0
        %629 = vmatmul.mubr.bf16.gmra.mrb[0].mxu0 %v588
        %v630 = vpop.f32.mrb[0].mxu0
        %v631 = vadd.f32 %v584, %v630
        %v632 = vpop.f32.mrb[0].mxu0
        %v633 = vadd.f32 %v584, %v632
        %v634 = vpop.f32.mrb[0].mxu0
        %v635 = vpop.f32.mrb[0].mxu0
        %636 = vdwg.mxu0
        %v637 = vmul.f32 %v631, 0.1
        %v638 = vmul.f32 %v633, 0.1
        %v639 = vmax.f32 %v631, %v637
        %v640 = vmax.f32 %v633, %v638
        %v641 = vadd.f32 %v639, %v302
        %v642 = vadd.f32 %v640, %v303
        %643 = vst [vmem:[%s292] sm:$0xff] %v641
        %644 = vst [vmem:[%s292 + $0x8] sm:$0xff] %v642
        %s645 = sand.u32 %s163, 1
        %s646 = scalar_lea.sflag [#allocation4], %s645
        %s647 = sand.u32 %s163, 1
        %s648 = smul.addr %s647, 16
        %s649 = scalar_lea.vmem [#allocation8], %s648
        // Predicated region
        $region57: #{tpu_custom_call.1} parent=43 // pred_check
          %p650 = pneg %p173
        $region58: #{tpu_custom_call.1} parent=43 // pred_check_branch
          %652 = sbr.rel (%p650) target = $region60
        $region59: #{tpu_custom_call.1} parent=43 // pred_region
          %s654 = ssub.s32 256, 256
          %655 = vsyncadd %s646, %s654
          %s656 = smul.addr %s24, 2
          %s657 = smul.addr %s656, 128
          %s658 = scalar_lea.hbm %s6, %s657
          %s660 = sshll.u32 %s649, 4
          %s661 = int_to_ptr.vmem [resolvable:$true] %s660
          %663 = dma.vmem_to_hbm [thread:$0]  %s661, 256, %s658, %s646
        $region60: #{tpu_custom_call.1} parent=43 // pred_fallthru
          _
      $region44: #{tpu_custom_call.1} parent=5 // pred_fallthru
        _
      %p664 = scmp.le.s32.totalorder 2, %s19
      // Predicated region
      $region61: #{tpu_custom_call.1} parent=5 // pred_check
        %p665 = pneg %p664
      $region62: #{tpu_custom_call.1} parent=5 // pred_check_branch
        %667 = sbr.rel (%p665) target = $region64
      $region63: #{tpu_custom_call.1} parent=5 // pred_region
        %s668 = ssub.s32 %s19, 2
        // Predicated region
        $region65: #{tpu_custom_call.1} parent=63 // pred_check
          %p669 = pneg %p179
        $region66: #{tpu_custom_call.1} parent=63 // pred_check_branch
          %671 = sbr.rel (%p669) target = $region68
        $region67: #{tpu_custom_call.1} parent=63 // pred_region
          %s672 = sand.u32 %s164, 1
          %s673 = scalar_lea.sflag [#allocation4], %s672
          %s674 = sand.u32 %s164, 1
          %s675 = smul.addr %s674, 16
          %s676 = scalar_lea.vmem [#allocation8], %s675
          %677 = dma.done %s673, 256
        $region68: #{tpu_custom_call.1} parent=63 // pred_fallthru
          _
      $region64: #{tpu_custom_call.1} parent=5 // pred_fallthru
        _
    $region6: #{tpu_custom_call.1} parent=1 // loop_footer
      %s23 = sadd.s32 1, %s19
    $region7: #{tpu_custom_call.1} parent=1 // loop_footer_branch
      %18 = sbr.rel target = $region3
    $region8: #{tpu_custom_call.1} parent=1 // loop_exit
      _
    %678 = vsyncpa [#allocation3], 1
    %s679 = scalar_lea.sflag [#allocation3], 1
    %680 = vsyncpa %s679, 1
    %681 = vsyncpa [#allocation6], 1
    %682 = vsyncpa [#allocation4], 1
    %s683 = scalar_lea.sflag [#allocation4], 1
    %684 = vsyncpa %s683, 1

</llo_original>
